<compile_context>
chip_gen: v5e
topology: v5e:2x2
jax: 0.10.0
libtpu: 0.0.40
codegen_flags: <defaults>
</compile_context>

<pallas_src>
import functools

import jax
import jax.numpy as jnp
from jax import lax
from jax.experimental import pallas as pl
from jax.experimental.pallas import tpu as pltpu


def _round_up(n, m):
    return ((n + m - 1) // m) * m


def _mlp_kernel(x_ref, w1_ref, b1_ref, w2_ref, b2_ref, w3_ref, b3_ref,
                out_ref, *, valid_out):
    # fc1 + ReLU  (bf16 operands -> MXU, f32 accumulation)
    h1 = jnp.dot(x_ref[...], w1_ref[...],
                 preferred_element_type=jnp.float32) + b1_ref[...]
    h1 = jnp.maximum(h1, 0.0)

    # fc2 + ReLU
    h2 = jnp.dot(h1.astype(w2_ref.dtype), w2_ref[...],
                 preferred_element_type=jnp.float32) + b2_ref[...]
    h2 = jnp.maximum(h2, 0.0)

    # fc3 (no activation)
    h3 = jnp.dot(h2.astype(w3_ref.dtype), w3_ref[...],
                 preferred_element_type=jnp.float32) + b3_ref[...]

    # Row-normalize over the first `valid_out` (un-padded) lanes:
    #   out = (h3 - mean) / (max - min)
    n_out = h3.shape[-1]
    if valid_out == n_out:
        mx = jnp.max(h3, axis=-1, keepdims=True)
        mn = jnp.min(h3, axis=-1, keepdims=True)
        s = jnp.sum(h3, axis=-1, keepdims=True)
    else:
        lane = lax.broadcasted_iota(jnp.int32, (1, n_out), 1)
        mask = lane < valid_out
        mx = jnp.max(jnp.where(mask, h3, -jnp.inf), axis=-1, keepdims=True)
        mn = jnp.min(jnp.where(mask, h3, jnp.inf), axis=-1, keepdims=True)
        s = jnp.sum(jnp.where(mask, h3, 0.0), axis=-1, keepdims=True)
    mid = s * (1.0 / valid_out)
    inv_range = pl.reciprocal(mx - mn, approx=True)   # EUP, not a VPU divide
    # Padding lanes get finite garbage here; they are sliced off in the wrapper.
    out_ref[...] = (h3 - mid) * inv_range


def mlp_forward(x, params, *, tile_b=256):
    """x: (B, num_features) f32. params: dict of w1,b1,w2,b2,w3,b3 (f32)."""
    w1, b1 = params["w1"], params["b1"]
    w2, b2 = params["w2"], params["b2"]
    w3, b3 = params["w3"], params["b3"]

    B, f_in = x.shape
    h1_dim, h2_dim = w1.shape[1], w2.shape[1]
    lsd_dim = w3.shape[1]

    # Lane-pad feature / output dims to multiples of 128 (zero-padding keeps
    # the matmuls exact; normalize masks the padded lanes).
    f_pad = _round_up(f_in, 128)
    out_pad = _round_up(lsd_dim, 128)

    # Batch tile: at least a sublane multiple of 8; pad batch to a tile multiple.
    tb = min(tile_b, _round_up(B, 8))
    b_pad = _round_up(B, tb)

    cdt = jnp.bfloat16  # matmul operand dtype (f32 accumulation on the MXU)

    xp = jnp.zeros((b_pad, f_pad), cdt).at[:B, :f_in].set(x.astype(cdt))
    w1p = jnp.zeros((f_pad, h1_dim), cdt).at[:f_in, :].set(w1.astype(cdt))
    w2p = w2.astype(cdt)
    w3p = jnp.zeros((h2_dim, out_pad), cdt).at[:, :lsd_dim].set(w3.astype(cdt))
    b1p = b1.astype(jnp.float32).reshape(1, h1_dim)
    b2p = b2.astype(jnp.float32).reshape(1, h2_dim)
    b3p = jnp.zeros((1, out_pad), jnp.float32).at[:, :lsd_dim].set(
        b3.astype(jnp.float32).reshape(1, lsd_dim))

    grid = (b_pad // tb,)

    # Weights / biases: full-array blocks, same block every grid step -> stay
    # resident in VMEM across the whole batch loop.
    def resident(a):
        return pl.BlockSpec(a.shape, lambda i: (0,) * a.ndim)

    out = pl.pallas_call(
        functools.partial(_mlp_kernel, valid_out=lsd_dim),
        out_shape=jax.ShapeDtypeStruct((b_pad, out_pad), jnp.float32),
        grid_spec=pltpu.PrefetchScalarGridSpec(
            num_scalar_prefetch=0,
            grid=grid,
            in_specs=[
                pl.BlockSpec((tb, f_pad), lambda i: (i, 0)),  # x tiled on batch
                resident(w1p), resident(b1p),
                resident(w2p), resident(b2p),
                resident(w3p), resident(b3p),
            ],
            out_specs=pl.BlockSpec((tb, out_pad), lambda i: (i, 0)),
        ),
        compiler_params=pltpu.CompilerParams(
            dimension_semantics=("parallel",),
        ),
    )(xp, w1p, b1p, w2p, b2p, w3p, b3p)

    return out[:B, :lsd_dim]


def init_params(key, num_features=100, lsd_dim=100):
    """Deterministic synthetic init (PyTorch-Linear-like uniform ranges)."""
    ks = jax.random.split(key, 6)

    def linear(kw, kb, fan_in, fan_out):
        bound = 1.0 / (fan_in ** 0.5)
        w = jax.random.uniform(kw, (fan_in, fan_out), jnp.float32, -bound, bound)
        b = jax.random.uniform(kb, (1, fan_out), jnp.float32, -bound, bound)
        return w, b

    w1, b1 = linear(ks[0], ks[1], num_features, 512)
    w2, b2 = linear(ks[2], ks[3], 512, 128)
    w3, b3 = linear(ks[4], ks[5], 128, lsd_dim)
    return {"w1": w1, "b1": b1, "w2": w2, "b2": b2, "w3": w3, "b3": b3}


def _reference(x, p):
    """Pure-JAX reference using the same bf16-operand / f32-accum matmuls."""
    c = jnp.bfloat16
    h1 = jnp.maximum(
        jnp.dot(x.astype(c), p["w1"].astype(c),
                preferred_element_type=jnp.float32) + p["b1"], 0.0)
    h2 = jnp.maximum(
        jnp.dot(h1.astype(c), p["w2"].astype(c),
                preferred_element_type=jnp.float32) + p["b2"], 0.0)
    h3 = jnp.dot(h2.astype(c), p["w3"].astype(c),
                 preferred_element_type=jnp.float32) + p["b3"]
    mx = jnp.max(h3, axis=-1, keepdims=True)
    mn = jnp.min(h3, axis=-1, keepdims=True)
    mid = jnp.mean(h3, axis=-1, keepdims=True)
    return (h3 - mid) / (mx - mn)


if __name__ == "__main__":
    key = jax.random.PRNGKey(0)
    k_x, k_p = jax.random.split(key)

    batch, num_features, lsd_dim = 8, 100, 100
    x = jax.random.normal(k_x, (batch, num_features), jnp.float32)
    params = init_params(k_p, num_features=num_features, lsd_dim=lsd_dim)

    out = jax.block_until_ready(mlp_forward(x, params))
    ref = jax.block_until_ready(_reference(x, params))

    assert out.shape == (batch, lsd_dim)
    assert bool(jnp.all(jnp.isfinite(out)))
    # Tolerance covers bf16 operands, MXU accumulation order, approx reciprocal.
    assert jnp.allclose(out, ref, atol=1e-2, rtol=1e-2)

    print("KERNEL_OK")
</pallas_src>

<mosaic_0001>
module attributes {stable_mosaic.version = 11 : i64} {
  func.func @_mlp_kernel(%arg0: i32, %arg1: memref<8x128xbf16, #tpu.memory_space<vmem>>, %arg2: memref<128x512xbf16, #tpu.memory_space<vmem>>, %arg3: memref<1x512xf32, #tpu.memory_space<vmem>>, %arg4: memref<512x128xbf16, #tpu.memory_space<vmem>>, %arg5: memref<1x128xf32, #tpu.memory_space<vmem>>, %arg6: memref<128x128xbf16, #tpu.memory_space<vmem>>, %arg7: memref<1x128xf32, #tpu.memory_space<vmem>>, %arg8: memref<8x128xf32, #tpu.memory_space<vmem>>) attributes {dimension_semantics = [#tpu.dimension_semantics<parallel>], iteration_bounds = array<i64: 1>, scalar_prefetch = 0 : i64, scratch_operands = 0 : i64, tpu.core_type = #tpu.core_type<tc>, window_params = [{transform_indices = @transform_0, window_bounds = array<i64: 8, 128>}, {pipeline_mode = #tpu.pipeline_mode<synchronous>, transform_indices = @transform_1, window_bounds = array<i64: 128, 512>}, {pipeline_mode = #tpu.pipeline_mode<synchronous>, transform_indices = @transform_2, window_bounds = array<i64: 1, 512>}, {pipeline_mode = #tpu.pipeline_mode<synchronous>, transform_indices = @transform_3, window_bounds = array<i64: 512, 128>}, {pipeline_mode = #tpu.pipeline_mode<synchronous>, transform_indices = @transform_4, window_bounds = array<i64: 1, 128>}, {pipeline_mode = #tpu.pipeline_mode<synchronous>, transform_indices = @transform_5, window_bounds = array<i64: 128, 128>}, {pipeline_mode = #tpu.pipeline_mode<synchronous>, transform_indices = @transform_6, window_bounds = array<i64: 1, 128>}, {transform_indices = @transform_7, window_bounds = array<i64: 8, 128>}]} {
    %c0 = arith.constant 0 : index
    %c0_0 = arith.constant 0 : index
    %0 = vector.load %arg1[%c0, %c0_0] : memref<8x128xbf16, #tpu.memory_space<vmem>>, vector<8x128xbf16>
    %c0_1 = arith.constant 0 : index
    %c0_2 = arith.constant 0 : index
    %1 = vector.load %arg2[%c0_1, %c0_2] : memref<128x512xbf16, #tpu.memory_space<vmem>>, vector<128x512xbf16>
    %cst = arith.constant dense<0.000000e+00> : vector<8x512xf32>
    %2 = tpu.matmul %0, %1, %cst {dimension_numbers = #tpu.dot_dimension_numbers<[1], [0], [0], [1], [0, 0, 1, 1], [], []>} : vector<8x128xbf16>, vector<128x512xbf16>, vector<8x512xf32> -> vector<8x512xf32>
    %c0_3 = arith.constant 0 : index
    %c0_4 = arith.constant 0 : index
    %3 = vector.load %arg3[%c0_3, %c0_4] : memref<1x512xf32, #tpu.memory_space<vmem>>, vector<1x512xf32>
    %4 = vector.broadcast %3 : vector<1x512xf32> to vector<8x512xf32>
    %5 = arith.addf %2, %4 : vector<8x512xf32>
    %cst_5 = arith.constant 0.000000e+00 : f32
    %6 = vector.broadcast %cst_5 : f32 to vector<8x512xf32>
    %7 = arith.maximumf %5, %6 : vector<8x512xf32>
    %8 = arith.truncf %7 : vector<8x512xf32> to vector<8x512xbf16>
    %c0_6 = arith.constant 0 : index
    %c0_7 = arith.constant 0 : index
    %9 = vector.load %arg4[%c0_6, %c0_7] : memref<512x128xbf16, #tpu.memory_space<vmem>>, vector<512x128xbf16>
    %cst_8 = arith.constant dense<0.000000e+00> : vector<8x128xf32>
    %10 = tpu.matmul %8, %9, %cst_8 {dimension_numbers = #tpu.dot_dimension_numbers<[1], [0], [0], [1], [0, 0, 1, 1], [], []>} : vector<8x512xbf16>, vector<512x128xbf16>, vector<8x128xf32> -> vector<8x128xf32>
    %c0_9 = arith.constant 0 : index
    %c0_10 = arith.constant 0 : index
    %11 = vector.load %arg5[%c0_9, %c0_10] : memref<1x128xf32, #tpu.memory_space<vmem>>, vector<1x128xf32>
    %12 = vector.broadcast %11 : vector<1x128xf32> to vector<8x128xf32>
    %13 = arith.addf %10, %12 : vector<8x128xf32>
    %cst_11 = arith.constant 0.000000e+00 : f32
    %14 = vector.broadcast %cst_11 : f32 to vector<8x128xf32>
    %15 = arith.maximumf %13, %14 : vector<8x128xf32>
    %16 = arith.truncf %15 : vector<8x128xf32> to vector<8x128xbf16>
    %c0_12 = arith.constant 0 : index
    %c0_13 = arith.constant 0 : index
    %17 = vector.load %arg6[%c0_12, %c0_13] : memref<128x128xbf16, #tpu.memory_space<vmem>>, vector<128x128xbf16>
    %cst_14 = arith.constant dense<0.000000e+00> : vector<8x128xf32>
    %18 = tpu.matmul %16, %17, %cst_14 {dimension_numbers = #tpu.dot_dimension_numbers<[1], [0], [0], [1], [0, 0, 1, 1], [], []>} : vector<8x128xbf16>, vector<128x128xbf16>, vector<8x128xf32> -> vector<8x128xf32>
    %c0_15 = arith.constant 0 : index
    %c0_16 = arith.constant 0 : index
    %19 = vector.load %arg7[%c0_15, %c0_16] : memref<1x128xf32, #tpu.memory_space<vmem>>, vector<1x128xf32>
    %20 = vector.broadcast %19 : vector<1x128xf32> to vector<8x128xf32>
    %21 = arith.addf %18, %20 : vector<8x128xf32>
    %22 = tpu.iota {dimensions = array<i32: 1>} : vector<1x128xi32>
    %c100_i32 = arith.constant 100 : i32
    %23 = vector.broadcast %c100_i32 : i32 to vector<1x128xi32>
    %24 = arith.cmpi slt, %22, %23 : vector<1x128xi32>
    %cst_17 = arith.constant 0xFF800000 : f32
    %25 = vector.shape_cast %24 : vector<1x128xi1> to vector<1x128xi1>
    %26 = vector.broadcast %25 : vector<1x128xi1> to vector<8x128xi1>
    %27 = vector.broadcast %cst_17 : f32 to vector<8x128xf32>
    %28 = arith.select %26, %21, %27 : vector<8x128xi1>, vector<8x128xf32>
    %cst_18 = arith.constant dense<0xFF800000> : vector<8xf32>
    %29 = vector.multi_reduction <maximumf>, %28, %cst_18 [1] : vector<8x128xf32> to vector<8xf32>
    %30 = vector.shape_cast %29 : vector<8xf32> to vector<8x1xf32>
    %cst_19 = arith.constant 0x7F800000 : f32
    %31 = vector.shape_cast %24 : vector<1x128xi1> to vector<1x128xi1>
    %32 = vector.broadcast %31 : vector<1x128xi1> to vector<8x128xi1>
    %33 = vector.broadcast %cst_19 : f32 to vector<8x128xf32>
    %34 = arith.select %32, %21, %33 : vector<8x128xi1>, vector<8x128xf32>
    %cst_20 = arith.constant dense<0x7F800000> : vector<8xf32>
    %35 = vector.multi_reduction <minimumf>, %34, %cst_20 [1] : vector<8x128xf32> to vector<8xf32>
    %36 = vector.shape_cast %35 : vector<8xf32> to vector<8x1xf32>
    %cst_21 = arith.constant 0.000000e+00 : f32
    %37 = vector.shape_cast %24 : vector<1x128xi1> to vector<1x128xi1>
    %38 = vector.broadcast %37 : vector<1x128xi1> to vector<8x128xi1>
    %39 = vector.broadcast %cst_21 : f32 to vector<8x128xf32>
    %40 = arith.select %38, %21, %39 : vector<8x128xi1>, vector<8x128xf32>
    %cst_22 = arith.constant dense<0.000000e+00> : vector<8xf32>
    %41 = vector.multi_reduction <add>, %40, %cst_22 [1] : vector<8x128xf32> to vector<8xf32>
    %42 = vector.shape_cast %41 : vector<8xf32> to vector<8x1xf32>
    %cst_23 = arith.constant 0.00999999977 : f32
    %43 = vector.broadcast %cst_23 : f32 to vector<8x1xf32>
    %44 = arith.mulf %42, %43 : vector<8x1xf32>
    %45 = arith.subf %30, %36 : vector<8x1xf32>
    %46 = tpu.reciprocal %45 {approx = true} : vector<8x1xf32> -> vector<8x1xf32>
    %47 = vector.broadcast %44 : vector<8x1xf32> to vector<8x128xf32>
    %48 = arith.subf %21, %47 : vector<8x128xf32>
    %49 = vector.broadcast %46 : vector<8x1xf32> to vector<8x128xf32>
    %50 = arith.mulf %48, %49 : vector<8x128xf32>
    %c0_24 = arith.constant 0 : index
    %c0_25 = arith.constant 0 : index
    %51 = vector.load %arg8[%c0_24, %c0_25] : memref<8x128xf32, #tpu.memory_space<vmem>>, vector<8x128xf32>
    tpu.vector_store %arg8[%c0_24, %c0_25], %50 {strides = array<i32>} : memref<8x128xf32, #tpu.memory_space<vmem>>, vector<8x128xf32>,
    return
  }
  func.func @transform_0(%arg0: i32) -> (i32, i32) {
    %c0_i32 = arith.constant 0 : i32
    %c0_i32_0 = arith.constant 0 : i32
    return %arg0, %c0_i32 : i32, i32
  }
  func.func @transform_1(%arg0: i32) -> (i32, i32) {
    %c0_i32 = arith.constant 0 : i32
    %c0_i32_0 = arith.constant 0 : i32
    %c0_i32_1 = arith.constant 0 : i32
    return %c0_i32, %c0_i32_0 : i32, i32
  }
  func.func @transform_2(%arg0: i32) -> (i32, i32) {
    %c0_i32 = arith.constant 0 : i32
    %c0_i32_0 = arith.constant 0 : i32
    %c0_i32_1 = arith.constant 0 : i32
    return %c0_i32, %c0_i32_0 : i32, i32
  }
  func.func @transform_3(%arg0: i32) -> (i32, i32) {
    %c0_i32 = arith.constant 0 : i32
    %c0_i32_0 = arith.constant 0 : i32
    %c0_i32_1 = arith.constant 0 : i32
    return %c0_i32, %c0_i32_0 : i32, i32
  }
  func.func @transform_4(%arg0: i32) -> (i32, i32) {
    %c0_i32 = arith.constant 0 : i32
    %c0_i32_0 = arith.constant 0 : i32
    %c0_i32_1 = arith.constant 0 : i32
    return %c0_i32, %c0_i32_0 : i32, i32
  }
  func.func @transform_5(%arg0: i32) -> (i32, i32) {
    %c0_i32 = arith.constant 0 : i32
    %c0_i32_0 = arith.constant 0 : i32
    %c0_i32_1 = arith.constant 0 : i32
    return %c0_i32, %c0_i32_0 : i32, i32
  }
  func.func @transform_6(%arg0: i32) -> (i32, i32) {
    %c0_i32 = arith.constant 0 : i32
    %c0_i32_0 = arith.constant 0 : i32
    %c0_i32_1 = arith.constant 0 : i32
    return %c0_i32, %c0_i32_0 : i32, i32
  }
  func.func @transform_7(%arg0: i32) -> (i32, i32) {
    %c0_i32 = arith.constant 0 : i32
    %c0_i32_0 = arith.constant 0 : i32
    return %arg0, %c0_i32 : i32, i32
  }
}

</mosaic_0001>

<llo_original>
// kernel: tpu_custom_call.1
$region0: #{tpu_custom_call.1}
  #allocation0 [shape = 'u32[]', space=smem, size = 0x4, offset = 0x4, fixed_abs, tag = 'smem constant byte address 0x4 - core index']
  #allocation1 [shape = 'u32[72,128]{1,0:T(1,128)}', space=vmem, size = 0x9000, scoped, tag = 'internal scratch']
  %s0 = inlined_call_operand.hbm [shape: bf16[8,128], index: 0, kind: input, shape index: {}]
  %s1 = inlined_call_operand.hbm [shape: bf16[128,512], index: 1, kind: input, shape index: {}]
  %s2 = inlined_call_operand.hbm [shape: f32[1,512], index: 2, kind: input, shape index: {}]
  %s3 = inlined_call_operand.hbm [shape: bf16[512,128], index: 3, kind: input, shape index: {}]
  %s4 = inlined_call_operand.vmem [shape: f32[1,128], index: 4, kind: input, shape index: {}]
  %s5 = inlined_call_operand.hbm [shape: bf16[128,128], index: 5, kind: input, shape index: {}]
  %s6 = inlined_call_operand.vmem [shape: f32[1,128], index: 6, kind: input, shape index: {}]
  %s7 = inlined_call_operand.hbm [shape: f32[8,128], index: 7, kind: output, shape index: {}]
  %s8 = sld [smem:[#allocation0]]
  $region58: #{tpu_custom_call.1} parent=0
    _
  %s10 = ssub.s32 1, %s8
  %s11 = scalar_select 0, %s10, %s8
  $region1: #{tpu_custom_call.1} parent=0
    #allocation2 [shape = 'u8[2048]{0}', space=vmem, size = 0x800, scoped, tag = 'input window, operand 0, single buffered']
    #allocation3 [shape = 's32[1]{0}', space=sflag, size = 0x4, scoped, tag = 'scoped memory for tpu_custom_call.1']
    #allocation4 [shape = 's32[1]{0}', space=sflag, size = 0x4, scoped, tag = 'scoped memory for tpu_custom_call.1']
    #allocation5 [shape = 'u8[131072]{0}', space=vmem, size = 0x20000, scoped, tag = 'input window, operand 1, single buffered']
    #allocation6 [shape = 's32[1]{0}', space=sflag, size = 0x4, scoped, tag = 'scoped memory for tpu_custom_call.1']
    #allocation7 [shape = 'u8[2048]{0}', space=vmem, size = 0x800, scoped, tag = 'input window, operand 2, single buffered']
    #allocation8 [shape = 'u8[131072]{0}', space=vmem, size = 0x20000, scoped, tag = 'input window, operand 3, single buffered']
    #allocation9 [shape = 's32[1]{0}', space=sflag, size = 0x4, scoped, tag = 'scoped memory for tpu_custom_call.1']
    #allocation10 [shape = 'u8[32768]{0}', space=vmem, size = 0x8000, scoped, tag = 'input window, operand 5, single buffered']
    #allocation11 [shape = 'u8[4096]{0}', space=vmem, size = 0x1000, scoped, tag = 'output window, operand 0, single buffered']
    %12 = vsyncpa [#allocation3], 0
    %13 = vsyncpa [#allocation6], 0
    %14 = vsyncpa [#allocation9], 0
    %15 = vsyncpa [#allocation4], 0
    // Predicated region
    $region2: #{tpu_custom_call.1} parent=1 // pred_check
      _
    $region3: #{tpu_custom_call.1} parent=1 // pred_check_branch
      %17 = sbr.rel (0) target = $region5
    $region4: #{tpu_custom_call.1} parent=1 // pred_region
      %19 = vsyncadd [#allocation3], 0
      %s21 = sshll.u32 %s0, 4
      %s22 = int_to_ptr.hbm [resolvable:$true] %s21
      %s23 = sshll.u32 [#allocation2], 4
      %s24 = int_to_ptr.vmem [resolvable:$true] %s23
      %26 = dma.hbm_to_vmem [thread:$0]  %s22, 64, %s24, [#allocation3]
    $region5: #{tpu_custom_call.1} parent=1 // pred_fallthru
      _
    // Predicated region
    $region6: #{tpu_custom_call.1} parent=1 // pred_check
      _
    $region7: #{tpu_custom_call.1} parent=1 // pred_check_branch
      %28 = sbr.rel (0) target = $region9
    $region8: #{tpu_custom_call.1} parent=1 // pred_region
      %30 = vsyncadd [#allocation6], 0
      %s31 = sshll.u32 %s1, 4
      %s32 = int_to_ptr.hbm [resolvable:$true] %s31
      %s33 = sshll.u32 [#allocation5], 4
      %s34 = int_to_ptr.vmem [resolvable:$true] %s33
      %39 = dma.hbm_to_vmem [thread:$0]  %s32, 4096, %s34, [#allocation6], 256, 256, 16
    $region9: #{tpu_custom_call.1} parent=1 // pred_fallthru
      _
    // Predicated region
    $region10: #{tpu_custom_call.1} parent=1 // pred_check
      _
    $region11: #{tpu_custom_call.1} parent=1 // pred_check_branch
      %41 = sbr.rel (0) target = $region13
    $region12: #{tpu_custom_call.1} parent=1 // pred_region
      %43 = vsyncadd [#allocation6], 0
      %s45 = sshll.u32 %s2, 4
      %s46 = int_to_ptr.hbm [resolvable:$true] %s45
      %s47 = sshll.u32 [#allocation7], 4
      %s48 = int_to_ptr.vmem [resolvable:$true] %s47
      %50 = dma.hbm_to_vmem [thread:$0]  %s46, 64, %s48, [#allocation6]
    $region13: #{tpu_custom_call.1} parent=1 // pred_fallthru
      _
    // Predicated region
    $region14: #{tpu_custom_call.1} parent=1 // pred_check
      _
    $region15: #{tpu_custom_call.1} parent=1 // pred_check_branch
      %52 = sbr.rel (0) target = $region17
    $region16: #{tpu_custom_call.1} parent=1 // pred_region
      %54 = vsyncadd [#allocation9], 0
      %s55 = sshll.u32 %s3, 4
      %s56 = int_to_ptr.hbm [resolvable:$true] %s55
      %s57 = sshll.u32 [#allocation8], 4
      %s58 = int_to_ptr.vmem [resolvable:$true] %s57
      %63 = dma.hbm_to_vmem [thread:$0]  %s56, 4096, %s58, [#allocation9], 64, 64, 4
    $region17: #{tpu_custom_call.1} parent=1 // pred_fallthru
      _
    // Predicated region
    $region18: #{tpu_custom_call.1} parent=1 // pred_check
      _
    $region19: #{tpu_custom_call.1} parent=1 // pred_check_branch
      %65 = sbr.rel (0) target = $region21
    $region20: #{tpu_custom_call.1} parent=1 // pred_region
      _
    $region21: #{tpu_custom_call.1} parent=1 // pred_fallthru
      _
    // Predicated region
    $region22: #{tpu_custom_call.1} parent=1 // pred_check
      _
    $region23: #{tpu_custom_call.1} parent=1 // pred_check_branch
      %67 = sbr.rel (0) target = $region25
    $region24: #{tpu_custom_call.1} parent=1 // pred_region
      %69 = vsyncadd [#allocation9], 0
      %s70 = sshll.u32 %s5, 4
      %s71 = int_to_ptr.hbm [resolvable:$true] %s70
      %s72 = sshll.u32 [#allocation10], 4
      %s73 = int_to_ptr.vmem [resolvable:$true] %s72
      %78 = dma.hbm_to_vmem [thread:$0]  %s71, 1024, %s73, [#allocation9], 64, 64, 4
    $region25: #{tpu_custom_call.1} parent=1 // pred_fallthru
      _
    // Predicated region
    $region26: #{tpu_custom_call.1} parent=1 // pred_check
      _
    $region27: #{tpu_custom_call.1} parent=1 // pred_check_branch
      %80 = sbr.rel (0) target = $region29
    $region28: #{tpu_custom_call.1} parent=1 // pred_region
      _
    $region29: #{tpu_custom_call.1} parent=1 // pred_fallthru
      _
    // Predicated region
    $region30: #{tpu_custom_call.1} parent=1 // pred_check
      _
    $region31: #{tpu_custom_call.1} parent=1 // pred_check_branch
      %82 = sbr.rel (0) target = $region33
    $region32: #{tpu_custom_call.1} parent=1 // pred_region
      %84 = dma.done [#allocation3], 64
    $region33: #{tpu_custom_call.1} parent=1 // pred_fallthru
      _
    // Predicated region
    $region34: #{tpu_custom_call.1} parent=1 // pred_check
      _
    $region35: #{tpu_custom_call.1} parent=1 // pred_check_branch
      %86 = sbr.rel (0) target = $region37
    $region36: #{tpu_custom_call.1} parent=1 // pred_region
      %88 = dma.done [#allocation6], 4096
    $region37: #{tpu_custom_call.1} parent=1 // pred_fallthru
      _
    // Predicated region
    $region38: #{tpu_custom_call.1} parent=1 // pred_check
      _
    $region39: #{tpu_custom_call.1} parent=1 // pred_check_branch
      %90 = sbr.rel (0) target = $region41
    $region40: #{tpu_custom_call.1} parent=1 // pred_region
      %92 = dma.done [#allocation6], 64
    $region41: #{tpu_custom_call.1} parent=1 // pred_fallthru
      _
    // Predicated region
    $region42: #{tpu_custom_call.1} parent=1 // pred_check
      _
    $region43: #{tpu_custom_call.1} parent=1 // pred_check_branch
      %94 = sbr.rel (0) target = $region45
    $region44: #{tpu_custom_call.1} parent=1 // pred_region
      %96 = dma.done [#allocation9], 4096
    $region45: #{tpu_custom_call.1} parent=1 // pred_fallthru
      _
    // Predicated region
    $region46: #{tpu_custom_call.1} parent=1 // pred_check
      _
    $region47: #{tpu_custom_call.1} parent=1 // pred_check_branch
      %98 = sbr.rel (0) target = $region49
    $region48: #{tpu_custom_call.1} parent=1 // pred_region
      %100 = dma.done [#allocation9], 1024
    $region49: #{tpu_custom_call.1} parent=1 // pred_fallthru
      _
    %v101 = vld [vmem:[#allocation2] sm:$0xf]
    %v102 = vld [vmem:[#allocation5] sm:$0xff]
    %v103 = vld [vmem:[#allocation5 + $0x8] sm:$0xff]
    %v104 = vld [vmem:[#allocation5 + $0x10] sm:$0xff]
    %v105 = vld [vmem:[#allocation5 + $0x18] sm:$0xff]
    %v106 = vld [vmem:[#allocation5 + $0x20] sm:$0xff]
    %v107 = vld [vmem:[#allocation5 + $0x28] sm:$0xff]
    %v108 = vld [vmem:[#allocation5 + $0x30] sm:$0xff]
    %v109 = vld [vmem:[#allocation5 + $0x38] sm:$0xff]
    %v110 = vld [vmem:[#allocation5 + $0x40] sm:$0xff]
    %v111 = vld [vmem:[#allocation5 + $0x48] sm:$0xff]
    %v112 = vld [vmem:[#allocation5 + $0x50] sm:$0xff]
    %v113 = vld [vmem:[#allocation5 + $0x58] sm:$0xff]
    %v114 = vld [vmem:[#allocation5 + $0x60] sm:$0xff]
    %v115 = vld [vmem:[#allocation5 + $0x68] sm:$0xff]
    %v116 = vld [vmem:[#allocation5 + $0x70] sm:$0xff]
    %v117 = vld [vmem:[#allocation5 + $0x78] sm:$0xff]
    %v118 = vld [vmem:[#allocation5 + $0x80] sm:$0xff]
    %v119 = vld [vmem:[#allocation5 + $0x88] sm:$0xff]
    %v120 = vld [vmem:[#allocation5 + $0x90] sm:$0xff]
    %v121 = vld [vmem:[#allocation5 + $0x98] sm:$0xff]
    %v122 = vld [vmem:[#allocation5 + $0xa0] sm:$0xff]
    %v123 = vld [vmem:[#allocation5 + $0xa8] sm:$0xff]
    %v124 = vld [vmem:[#allocation5 + $0xb0] sm:$0xff]
    %v125 = vld [vmem:[#allocation5 + $0xb8] sm:$0xff]
    %v126 = vld [vmem:[#allocation5 + $0xc0] sm:$0xff]
    %v127 = vld [vmem:[#allocation5 + $0xc8] sm:$0xff]
    %v128 = vld [vmem:[#allocation5 + $0xd0] sm:$0xff]
    %v129 = vld [vmem:[#allocation5 + $0xd8] sm:$0xff]
    %v130 = vld [vmem:[#allocation5 + $0xe0] sm:$0xff]
    %v131 = vld [vmem:[#allocation5 + $0xe8] sm:$0xff]
    %v132 = vld [vmem:[#allocation5 + $0xf0] sm:$0xff]
    %v133 = vld [vmem:[#allocation5 + $0xf8] sm:$0xff]
    %v134 = vld [vmem:[#allocation7] sm:$0xf]
    %v136 = vperm.slane %v134, 0
    %v137 = vperm.slane %v134, 1
    %v138 = vperm.slane %v134, 2
    %v139 = vperm.slane %v134, 3
    %v176 = vunpack.c.l.b16 %v102
    %v177 = vunpack.c.h.b16 %v102
    %v178 = vunpack.c.l.b16 %v103
    %v179 = vunpack.c.h.b16 %v103
    %v180 = vunpack.c.l.b16 %v104
    %v181 = vunpack.c.h.b16 %v104
    %v182 = vunpack.c.l.b16 %v105
    %v183 = vunpack.c.h.b16 %v105
    %v184 = vunpack.c.l.b16 %v106
    %v185 = vunpack.c.h.b16 %v106
    %v186 = vunpack.c.l.b16 %v107
    %v187 = vunpack.c.h.b16 %v107
    %v188 = vunpack.c.l.b16 %v108
    %v189 = vunpack.c.h.b16 %v108
    %v190 = vunpack.c.l.b16 %v109
    %v191 = vunpack.c.h.b16 %v109
    %v192 = vunpack.c.l.b16 %v110
    %v193 = vunpack.c.h.b16 %v110
    %v194 = vunpack.c.l.b16 %v111
    %v195 = vunpack.c.h.b16 %v111
    %v196 = vunpack.c.l.b16 %v112
    %v197 = vunpack.c.h.b16 %v112
    %v198 = vunpack.c.l.b16 %v113
    %v199 = vunpack.c.h.b16 %v113
    %v200 = vunpack.c.l.b16 %v114
    %v201 = vunpack.c.h.b16 %v114
    %v202 = vunpack.c.l.b16 %v115
    %v203 = vunpack.c.h.b16 %v115
    %v204 = vunpack.c.l.b16 %v116
    %v205 = vunpack.c.h.b16 %v116
    %v206 = vunpack.c.l.b16 %v117
    %v207 = vunpack.c.h.b16 %v117
    %v208 = vunpack.c.l.b16 %v118
    %v209 = vunpack.c.h.b16 %v118
    %v210 = vunpack.c.l.b16 %v119
    %v211 = vunpack.c.h.b16 %v119
    %v212 = vunpack.c.l.b16 %v120
    %v213 = vunpack.c.h.b16 %v120
    %v214 = vunpack.c.l.b16 %v121
    %v215 = vunpack.c.h.b16 %v121
    %v216 = vunpack.c.l.b16 %v122
    %v217 = vunpack.c.h.b16 %v122
    %v218 = vunpack.c.l.b16 %v123
    %v219 = vunpack.c.h.b16 %v123
    %v220 = vunpack.c.l.b16 %v124
    %v221 = vunpack.c.h.b16 %v124
    %v222 = vunpack.c.l.b16 %v125
    %v223 = vunpack.c.h.b16 %v125
    %v224 = vunpack.c.l.b16 %v126
    %v225 = vunpack.c.h.b16 %v126
    %v226 = vunpack.c.l.b16 %v127
    %v227 = vunpack.c.h.b16 %v127
    %v228 = vunpack.c.l.b16 %v128
    %v229 = vunpack.c.h.b16 %v128
    %v230 = vunpack.c.l.b16 %v129
    %v231 = vunpack.c.h.b16 %v129
    %v232 = vunpack.c.l.b16 %v130
    %v233 = vunpack.c.h.b16 %v130
    %v234 = vunpack.c.l.b16 %v131
    %v235 = vunpack.c.h.b16 %v131
    %v236 = vunpack.c.l.b16 %v132
    %v237 = vunpack.c.h.b16 %v132
    %v238 = vunpack.c.l.b16 %v133
    %v239 = vunpack.c.h.b16 %v133
    %v240 = vpack.c.b16 %v180, %v176
    %v241 = vpack.c.b16 %v181, %v177
    %v242 = vpack.c.b16 %v182, %v178
    %v243 = vpack.c.b16 %v183, %v179
    %v244 = vpack.c.b16 %v188, %v184
    %v245 = vpack.c.b16 %v189, %v185
    %v246 = vpack.c.b16 %v190, %v186
    %v247 = vpack.c.b16 %v191, %v187
    %v248 = vpack.c.b16 %v196, %v192
    %v249 = vpack.c.b16 %v197, %v193
    %v250 = vpack.c.b16 %v198, %v194
    %v251 = vpack.c.b16 %v199, %v195
    %v252 = vpack.c.b16 %v204, %v200
    %v253 = vpack.c.b16 %v205, %v201
    %v254 = vpack.c.b16 %v206, %v202
    %v255 = vpack.c.b16 %v207, %v203
    %v256 = vpack.c.b16 %v212, %v208
    %v257 = vpack.c.b16 %v213, %v209
    %v258 = vpack.c.b16 %v214, %v210
    %v259 = vpack.c.b16 %v215, %v211
    %v260 = vpack.c.b16 %v220, %v216
    %v261 = vpack.c.b16 %v221, %v217
    %v262 = vpack.c.b16 %v222, %v218
    %v263 = vpack.c.b16 %v223, %v219
    %v264 = vpack.c.b16 %v228, %v224
    %v265 = vpack.c.b16 %v229, %v225
    %v266 = vpack.c.b16 %v230, %v226
    %v267 = vpack.c.b16 %v231, %v227
    %v268 = vpack.c.b16 %v236, %v232
    %v269 = vpack.c.b16 %v237, %v233
    %v270 = vpack.c.b16 %v238, %v234
    %v271 = vpack.c.b16 %v239, %v235
    %304 = vmatpush.bf16.msra.mxu0 %v268
    %305 = vmatpush.bf16.msra.mxu0 %v264
    %306 = vmatpush.bf16.msra.mxu0 %v260
    %307 = vmatpush.bf16.msra.mxu0 %v256
    %308 = vmatpush.bf16.msra.mxu0 %v252
    %309 = vmatpush.bf16.msra.mxu0 %v248
    %310 = vmatpush.bf16.msra.mxu0 %v244
    %311 = vmatpush.bf16.msra.mxu0 %v240
    %312 = vmatmul.bf16.gmra.mxu0 %v101
    %v313 = vpop.f32.mrf.mxu0
    %v314 = vadd.f32 %v136, %v313
    %v315 = vpop.f32.mrf.mxu0
    %316 = vdwg.mxu0
    %317 = vmatpush.bf16.msra.mxu0 %v269
    %318 = vmatpush.bf16.msra.mxu0 %v265
    %319 = vmatpush.bf16.msra.mxu0 %v261
    %320 = vmatpush.bf16.msra.mxu0 %v257
    %321 = vmatpush.bf16.msra.mxu0 %v253
    %322 = vmatpush.bf16.msra.mxu0 %v249
    %323 = vmatpush.bf16.msra.mxu0 %v245
    %324 = vmatpush.bf16.msra.mxu0 %v241
    %325 = vmatmul.bf16.gmra.mxu0 %v101
    %v326 = vpop.f32.mrf.mxu0
    %v327 = vadd.f32 %v137, %v326
    %v328 = vpop.f32.mrf.mxu0
    %329 = vdwg.mxu0
    %330 = vmatpush.bf16.msra.mxu0 %v270
    %331 = vmatpush.bf16.msra.mxu0 %v266
    %332 = vmatpush.bf16.msra.mxu0 %v262
    %333 = vmatpush.bf16.msra.mxu0 %v258
    %334 = vmatpush.bf16.msra.mxu0 %v254
    %335 = vmatpush.bf16.msra.mxu0 %v250
    %336 = vmatpush.bf16.msra.mxu0 %v246
    %337 = vmatpush.bf16.msra.mxu0 %v242
    %338 = vmatmul.bf16.gmra.mxu0 %v101
    %v339 = vpop.f32.mrf.mxu0
    %v340 = vadd.f32 %v138, %v339
    %v341 = vpop.f32.mrf.mxu0
    %342 = vdwg.mxu0
    %343 = vmatpush.bf16.msra.mxu0 %v271
    %344 = vmatpush.bf16.msra.mxu0 %v267
    %345 = vmatpush.bf16.msra.mxu0 %v263
    %346 = vmatpush.bf16.msra.mxu0 %v259
    %347 = vmatpush.bf16.msra.mxu0 %v255
    %348 = vmatpush.bf16.msra.mxu0 %v251
    %349 = vmatpush.bf16.msra.mxu0 %v247
    %350 = vmatpush.bf16.msra.mxu0 %v243
    %351 = vmatmul.bf16.gmra.mxu0 %v101
    %v352 = vpop.f32.mrf.mxu0
    %v353 = vadd.f32 %v139, %v352
    %v354 = vpop.f32.mrf.mxu0
    %355 = vdwg.mxu0
    %v356 = vmax.f32 %v314, 0.0
    %v357 = vmax.f32 %v327, 0.0
    %v358 = vmax.f32 %v340, 0.0
    %v359 = vmax.f32 %v353, 0.0
    %v360 = vpack.c.bf16 %v356, %v356
    %v361 = vpack.c.bf16 %v357, %v357
    %v362 = vpack.c.bf16 %v358, %v358
    %v363 = vpack.c.bf16 %v359, %v359
    %v364 = vld [vmem:[#allocation8] sm:$0xf]
    %v365 = vld [vmem:[#allocation8 + $0x4] sm:$0xf]
    %v366 = vld [vmem:[#allocation8 + $0x8] sm:$0xf]
    %v367 = vld [vmem:[#allocation8 + $0xc] sm:$0xf]
    %v368 = vld [vmem:[#allocation8 + $0x10] sm:$0xf]
    %v369 = vld [vmem:[#allocation8 + $0x14] sm:$0xf]
    %v370 = vld [vmem:[#allocation8 + $0x18] sm:$0xf]
    %v371 = vld [vmem:[#allocation8 + $0x1c] sm:$0xf]
    %v372 = vld [vmem:[#allocation8 + $0x20] sm:$0xf]
    %v373 = vld [vmem:[#allocation8 + $0x24] sm:$0xf]
    %v374 = vld [vmem:[#allocation8 + $0x28] sm:$0xf]
    %v375 = vld [vmem:[#allocation8 + $0x2c] sm:$0xf]
    %v376 = vld [vmem:[#allocation8 + $0x30] sm:$0xf]
    %v377 = vld [vmem:[#allocation8 + $0x34] sm:$0xf]
    %v378 = vld [vmem:[#allocation8 + $0x38] sm:$0xf]
    %v379 = vld [vmem:[#allocation8 + $0x3c] sm:$0xf]
    %v380 = vld [vmem:[#allocation8 + $0x40] sm:$0xf]
    %v381 = vld [vmem:[#allocation8 + $0x44] sm:$0xf]
    %v382 = vld [vmem:[#allocation8 + $0x48] sm:$0xf]
    %v383 = vld [vmem:[#allocation8 + $0x4c] sm:$0xf]
    %v384 = vld [vmem:[#allocation8 + $0x50] sm:$0xf]
    %v385 = vld [vmem:[#allocation8 + $0x54] sm:$0xf]
    %v386 = vld [vmem:[#allocation8 + $0x58] sm:$0xf]
    %v387 = vld [vmem:[#allocation8 + $0x5c] sm:$0xf]
    %v388 = vld [vmem:[#allocation8 + $0x60] sm:$0xf]
    %v389 = vld [vmem:[#allocation8 + $0x64] sm:$0xf]
    %v390 = vld [vmem:[#allocation8 + $0x68] sm:$0xf]
    %v391 = vld [vmem:[#allocation8 + $0x6c] sm:$0xf]
    %v392 = vld [vmem:[#allocation8 + $0x70] sm:$0xf]
    %v393 = vld [vmem:[#allocation8 + $0x74] sm:$0xf]
    %v394 = vld [vmem:[#allocation8 + $0x78] sm:$0xf]
    %v395 = vld [vmem:[#allocation8 + $0x7c] sm:$0xf]
    %v396 = vld [vmem:[#allocation8 + $0x80] sm:$0xf]
    %v397 = vld [vmem:[#allocation8 + $0x84] sm:$0xf]
    %v398 = vld [vmem:[#allocation8 + $0x88] sm:$0xf]
    %v399 = vld [vmem:[#allocation8 + $0x8c] sm:$0xf]
    %v400 = vld [vmem:[#allocation8 + $0x90] sm:$0xf]
    %v401 = vld [vmem:[#allocation8 + $0x94] sm:$0xf]
    %v402 = vld [vmem:[#allocation8 + $0x98] sm:$0xf]
    %v403 = vld [vmem:[#allocation8 + $0x9c] sm:$0xf]
    %v404 = vld [vmem:[#allocation8 + $0xa0] sm:$0xf]
    %v405 = vld [vmem:[#allocation8 + $0xa4] sm:$0xf]
    %v406 = vld [vmem:[#allocation8 + $0xa8] sm:$0xf]
    %v407 = vld [vmem:[#allocation8 + $0xac] sm:$0xf]
    %v408 = vld [vmem:[#allocation8 + $0xb0] sm:$0xf]
    %v409 = vld [vmem:[#allocation8 + $0xb4] sm:$0xf]
    %v410 = vld [vmem:[#allocation8 + $0xb8] sm:$0xf]
    %v411 = vld [vmem:[#allocation8 + $0xbc] sm:$0xf]
    %v412 = vld [vmem:[#allocation8 + $0xc0] sm:$0xf]
    %v413 = vld [vmem:[#allocation8 + $0xc4] sm:$0xf]
    %v414 = vld [vmem:[#allocation8 + $0xc8] sm:$0xf]
    %v415 = vld [vmem:[#allocation8 + $0xcc] sm:$0xf]
    %v416 = vld [vmem:[#allocation8 + $0xd0] sm:$0xf]
    %v417 = vld [vmem:[#allocation8 + $0xd4] sm:$0xf]
    %v418 = vld [vmem:[#allocation8 + $0xd8] sm:$0xf]
    %v419 = vld [vmem:[#allocation8 + $0xdc] sm:$0xf]
    %v420 = vld [vmem:[#allocation8 + $0xe0] sm:$0xf]
    %v421 = vld [vmem:[#allocation8 + $0xe4] sm:$0xf]
    %v422 = vld [vmem:[#allocation8 + $0xe8] sm:$0xf]
    %v423 = vld [vmem:[#allocation8 + $0xec] sm:$0xf]
    %v424 = vld [vmem:[#allocation8 + $0xf0] sm:$0xf]
    %v425 = vld [vmem:[#allocation8 + $0xf4] sm:$0xf]
    %v426 = vld [vmem:[#allocation8 + $0xf8] sm:$0xf]
    %v427 = vld [vmem:[#allocation8 + $0xfc] sm:$0xf]
    %v428 = vld [vmem:[%s4] sm:$0x1]
    %v430 = vperm.slane %v428, 0
    %v496 = vunpack.c.l.b16 %v364
    %v497 = vunpack.c.l.b16 %v365
    %v498 = vunpack.c.l.b16 %v366
    %v499 = vunpack.c.l.b16 %v367
    %v500 = vunpack.c.l.b16 %v368
    %v501 = vunpack.c.l.b16 %v369
    %v502 = vunpack.c.l.b16 %v370
    %v503 = vunpack.c.l.b16 %v371
    %v504 = vunpack.c.l.b16 %v372
    %v505 = vunpack.c.l.b16 %v373
    %v506 = vunpack.c.l.b16 %v374
    %v507 = vunpack.c.l.b16 %v375
    %v508 = vunpack.c.l.b16 %v376
    %v509 = vunpack.c.l.b16 %v377
    %v510 = vunpack.c.l.b16 %v378
    %v511 = vunpack.c.l.b16 %v379
    %v512 = vunpack.c.l.b16 %v380
    %v513 = vunpack.c.l.b16 %v381
    %v514 = vunpack.c.l.b16 %v382
    %v515 = vunpack.c.l.b16 %v383
    %v516 = vunpack.c.l.b16 %v384
    %v517 = vunpack.c.l.b16 %v385
    %v518 = vunpack.c.l.b16 %v386
    %v519 = vunpack.c.l.b16 %v387
    %v520 = vunpack.c.l.b16 %v388
    %v521 = vunpack.c.l.b16 %v389
    %v522 = vunpack.c.l.b16 %v390
    %v523 = vunpack.c.l.b16 %v391
    %v524 = vunpack.c.l.b16 %v392
    %v525 = vunpack.c.l.b16 %v393
    %v526 = vunpack.c.l.b16 %v394
    %v527 = vunpack.c.l.b16 %v395
    %v528 = vunpack.c.l.b16 %v396
    %v529 = vunpack.c.l.b16 %v397
    %v530 = vunpack.c.l.b16 %v398
    %v531 = vunpack.c.l.b16 %v399
    %v532 = vunpack.c.l.b16 %v400
    %v533 = vunpack.c.l.b16 %v401
    %v534 = vunpack.c.l.b16 %v402
    %v535 = vunpack.c.l.b16 %v403
    %v536 = vunpack.c.l.b16 %v404
    %v537 = vunpack.c.l.b16 %v405
    %v538 = vunpack.c.l.b16 %v406
    %v539 = vunpack.c.l.b16 %v407
    %v540 = vunpack.c.l.b16 %v408
    %v541 = vunpack.c.l.b16 %v409
    %v542 = vunpack.c.l.b16 %v410
    %v543 = vunpack.c.l.b16 %v411
    %v544 = vunpack.c.l.b16 %v412
    %v545 = vunpack.c.l.b16 %v413
    %v546 = vunpack.c.l.b16 %v414
    %v547 = vunpack.c.l.b16 %v415
    %v548 = vunpack.c.l.b16 %v416
    %v549 = vunpack.c.l.b16 %v417
    %v550 = vunpack.c.l.b16 %v418
    %v551 = vunpack.c.l.b16 %v419
    %v552 = vunpack.c.l.b16 %v420
    %v553 = vunpack.c.l.b16 %v421
    %v554 = vunpack.c.l.b16 %v422
    %v555 = vunpack.c.l.b16 %v423
    %v556 = vunpack.c.l.b16 %v424
    %v557 = vunpack.c.l.b16 %v425
    %v558 = vunpack.c.l.b16 %v426
    %v559 = vunpack.c.l.b16 %v427
    %v560 = vpack.c.b16 %v497, %v496
    %v561 = vpack.c.b16 %v499, %v498
    %v562 = vpack.c.b16 %v501, %v500
    %v563 = vpack.c.b16 %v503, %v502
    %v564 = vpack.c.b16 %v505, %v504
    %v565 = vpack.c.b16 %v507, %v506
    %v566 = vpack.c.b16 %v509, %v508
    %v567 = vpack.c.b16 %v511, %v510
    %v568 = vpack.c.b16 %v513, %v512
    %v569 = vpack.c.b16 %v515, %v514
    %v570 = vpack.c.b16 %v517, %v516
    %v571 = vpack.c.b16 %v519, %v518
    %v572 = vpack.c.b16 %v521, %v520
    %v573 = vpack.c.b16 %v523, %v522
    %v574 = vpack.c.b16 %v525, %v524
    %v575 = vpack.c.b16 %v527, %v526
    %v576 = vpack.c.b16 %v529, %v528
    %v577 = vpack.c.b16 %v531, %v530
    %v578 = vpack.c.b16 %v533, %v532
    %v579 = vpack.c.b16 %v535, %v534
    %v580 = vpack.c.b16 %v537, %v536
    %v581 = vpack.c.b16 %v539, %v538
    %v582 = vpack.c.b16 %v541, %v540
    %v583 = vpack.c.b16 %v543, %v542
    %v584 = vpack.c.b16 %v545, %v544
    %v585 = vpack.c.b16 %v547, %v546
    %v586 = vpack.c.b16 %v549, %v548
    %v587 = vpack.c.b16 %v551, %v550
    %v588 = vpack.c.b16 %v553, %v552
    %v589 = vpack.c.b16 %v555, %v554
    %v590 = vpack.c.b16 %v557, %v556
    %v591 = vpack.c.b16 %v559, %v558
    %624 = vmatpush.bf16.msra.mxu0 %v567
    %625 = vmatpush.bf16.msra.mxu0 %v566
    %626 = vmatpush.bf16.msra.mxu0 %v565
    %627 = vmatpush.bf16.msra.mxu0 %v564
    %628 = vmatpush.bf16.msra.mxu0 %v563
    %629 = vmatpush.bf16.msra.mxu0 %v562
    %630 = vmatpush.bf16.msra.mxu0 %v561
    %631 = vmatpush.bf16.msra.mxu0 %v560
    %632 = vmatmul.bf16.gmra.mxu0 %v360
    %v633 = vpop.f32.mrf.mxu0
    %v634 = vadd.f32 %v430, %v633
    %v635 = vpop.f32.mrf.mxu0
    %636 = vdwg.mxu0
    %637 = vmatpush.bf16.msra.mxu0 %v575
    %638 = vmatpush.bf16.msra.mxu0 %v574
    %639 = vmatpush.bf16.msra.mxu0 %v573
    %640 = vmatpush.bf16.msra.mxu0 %v572
    %641 = vmatpush.bf16.msra.mxu0 %v571
    %642 = vmatpush.bf16.msra.mxu0 %v570
    %643 = vmatpush.bf16.msra.mxu0 %v569
    %644 = vmatpush.bf16.msra.mxu0 %v568
    %645 = vmatmul.bf16.gmra.mxu0 %v361
    %v646 = vpop.f32.mrf.mxu0
    %v647 = vadd.f32 %v634, %v646
    %v648 = vpop.f32.mrf.mxu0
    %649 = vdwg.mxu0
    %650 = vmatpush.bf16.msra.mxu0 %v583
    %651 = vmatpush.bf16.msra.mxu0 %v582
    %652 = vmatpush.bf16.msra.mxu0 %v581
    %653 = vmatpush.bf16.msra.mxu0 %v580
    %654 = vmatpush.bf16.msra.mxu0 %v579
    %655 = vmatpush.bf16.msra.mxu0 %v578
    %656 = vmatpush.bf16.msra.mxu0 %v577
    %657 = vmatpush.bf16.msra.mxu0 %v576
    %658 = vmatmul.bf16.gmra.mxu0 %v362
    %v659 = vpop.f32.mrf.mxu0
    %v660 = vadd.f32 %v647, %v659
    %v661 = vpop.f32.mrf.mxu0
    %662 = vdwg.mxu0
    %663 = vmatpush.bf16.msra.mxu0 %v591
    %664 = vmatpush.bf16.msra.mxu0 %v590
    %665 = vmatpush.bf16.msra.mxu0 %v589
    %666 = vmatpush.bf16.msra.mxu0 %v588
    %667 = vmatpush.bf16.msra.mxu0 %v587
    %668 = vmatpush.bf16.msra.mxu0 %v586
    %669 = vmatpush.bf16.msra.mxu0 %v585
    %670 = vmatpush.bf16.msra.mxu0 %v584
    %671 = vmatmul.bf16.gmra.mxu0 %v363
    %v672 = vpop.f32.mrf.mxu0
    %v673 = vadd.f32 %v660, %v672
    %v674 = vpop.f32.mrf.mxu0
    %675 = vdwg.mxu0
    %v676 = vmax.f32 %v673, 0.0
    %v677 = vpack.c.bf16 %v676, %v676
    %v678 = vld [vmem:[#allocation10] sm:$0xf]
    %v679 = vld [vmem:[#allocation10 + $0x4] sm:$0xf]
    %v680 = vld [vmem:[#allocation10 + $0x8] sm:$0xf]
    %v681 = vld [vmem:[#allocation10 + $0xc] sm:$0xf]
    %v682 = vld [vmem:[#allocation10 + $0x10] sm:$0xf]
    %v683 = vld [vmem:[#allocation10 + $0x14] sm:$0xf]
    %v684 = vld [vmem:[#allocation10 + $0x18] sm:$0xf]
    %v685 = vld [vmem:[#allocation10 + $0x1c] sm:$0xf]
    %v686 = vld [vmem:[#allocation10 + $0x20] sm:$0xf]
    %v687 = vld [vmem:[#allocation10 + $0x24] sm:$0xf]
    %v688 = vld [vmem:[#allocation10 + $0x28] sm:$0xf]
    %v689 = vld [vmem:[#allocation10 + $0x2c] sm:$0xf]
    %v690 = vld [vmem:[#allocation10 + $0x30] sm:$0xf]
    %v691 = vld [vmem:[#allocation10 + $0x34] sm:$0xf]
    %v692 = vld [vmem:[#allocation10 + $0x38] sm:$0xf]
    %v693 = vld [vmem:[#allocation10 + $0x3c] sm:$0xf]
    %v694 = vld [vmem:[%s6] sm:$0x1]
    %v696 = vperm.slane %v694, 0
    %v714 = vunpack.c.l.b16 %v678
    %v715 = vunpack.c.l.b16 %v679
    %v716 = vunpack.c.l.b16 %v680
    %v717 = vunpack.c.l.b16 %v681
    %v718 = vunpack.c.l.b16 %v682
    %v719 = vunpack.c.l.b16 %v683
    %v720 = vunpack.c.l.b16 %v684
    %v721 = vunpack.c.l.b16 %v685
    %v722 = vunpack.c.l.b16 %v686
    %v723 = vunpack.c.l.b16 %v687
    %v724 = vunpack.c.l.b16 %v688
    %v725 = vunpack.c.l.b16 %v689
    %v726 = vunpack.c.l.b16 %v690
    %v727 = vunpack.c.l.b16 %v691
    %v728 = vunpack.c.l.b16 %v692
    %v729 = vunpack.c.l.b16 %v693
    %v730 = vpack.c.b16 %v715, %v714
    %v731 = vpack.c.b16 %v717, %v716
    %v732 = vpack.c.b16 %v719, %v718
    %v733 = vpack.c.b16 %v721, %v720
    %v734 = vpack.c.b16 %v723, %v722
    %v735 = vpack.c.b16 %v725, %v724
    %v736 = vpack.c.b16 %v727, %v726
    %v737 = vpack.c.b16 %v729, %v728
    %746 = vmatpush.bf16.msra.mxu0 %v737
    %747 = vmatpush.bf16.msra.mxu0 %v736
    %748 = vmatpush.bf16.msra.mxu0 %v735
    %749 = vmatpush.bf16.msra.mxu0 %v734
    %750 = vmatpush.bf16.msra.mxu0 %v733
    %751 = vmatpush.bf16.msra.mxu0 %v732
    %752 = vmatpush.bf16.msra.mxu0 %v731
    %753 = vmatpush.bf16.msra.mxu0 %v730
    %754 = vmatmul.bf16.gmra.mxu0 %v677
    %v755 = vpop.f32.mrf.mxu0
    %v756 = vadd.f32 %v696, %v755
    %v757 = vpop.f32.mrf.mxu0
    %758 = vdwg.mxu0
    %v759 = vlaneseq
    %v760 = vand.u32 %v759, 127
    %vm761 = vcmp.lt.s32.totalorder %v760, 100
    %v762 = vsel %vm761, 1, 0
    %vm763 = vcmp.eq.s32.totalorder %v762, 1
    %v764 = vsel %vm763, %v756, -inf
    %765 = vmax.xlane.f32.xlu0 %v764
    %v766 = vpop.xlane.xlu0 %765
    %v767 = vsel %vm763, %v756, inf
    %768 = vmin.xlane.f32.xlu0 %v767
    %v769 = vpop.xlane.xlu0 %768
    %v770 = vsel %vm763, %v756, 0.0
    %771 = vadd.xlane.f32.xlu0 %v770
    %v772 = vpop.xlane.xlu0 %771
    %v773 = vmul.f32 %v772, 0.01
    %v774 = vsub.f32 %v766, %v769
    %v775 = vrcp.pop %v774
    %v776 = vsub.f32 %v756, %v773
    %v777 = vmul.f32 %v776, %v775
    %778 = vst [vmem:[#allocation11] sm:$0xff] %v777
    // Predicated region
    $region50: #{tpu_custom_call.1} parent=1 // pred_check
      _
    $region51: #{tpu_custom_call.1} parent=1 // pred_check_branch
      %780 = sbr.rel (0) target = $region53
    $region52: #{tpu_custom_call.1} parent=1 // pred_region
      %782 = vsyncadd [#allocation4], 0
      %s784 = sshll.u32 [#allocation11], 4
      %s785 = int_to_ptr.vmem [resolvable:$true] %s784
      %s786 = sshll.u32 %s7, 4
      %s787 = int_to_ptr.hbm [resolvable:$true] %s786
      %789 = dma.vmem_to_hbm [thread:$0]  %s785, 128, %s787, [#allocation4]
    $region53: #{tpu_custom_call.1} parent=1 // pred_fallthru
      _
    // Predicated region
    $region54: #{tpu_custom_call.1} parent=1 // pred_check
      _
    $region55: #{tpu_custom_call.1} parent=1 // pred_check_branch
      %791 = sbr.rel (0) target = $region57
    $region56: #{tpu_custom_call.1} parent=1 // pred_region
      %793 = dma.done [#allocation4], 128
    $region57: #{tpu_custom_call.1} parent=1 // pred_fallthru
      _
    %794 = vsyncpa [#allocation3], 1
    %795 = vsyncpa [#allocation6], 1
    %796 = vsyncpa [#allocation9], 1
    %797 = vsyncpa [#allocation4], 1

</llo_original>
